<compile_context>
chip_gen: v5e
topology: v5e:2x2
jax: 0.10.0
libtpu: 0.0.40
codegen_flags: <defaults>
</compile_context>

<pallas_src>
import jax
import jax.numpy as jnp
from jax import lax
from jax.experimental import pallas as pl
from jax.experimental.pallas import tpu as pltpu


def _round_up(n, m):
    return ((n + m - 1) // m) * m


def _make_kernel(chunk, num_chunks):
    """Build the fused MLP kernel for a (TB, D) x block, strip-mined in
    `chunk`-row slices (num_chunks = TB // chunk, static)."""

    def kernel(x_ref, w1_ref, b1_ref, w2_ref, b2_ref, w3_ref, b3_ref, o_ref):
        # x_ref: (TB, D) in the input's HBM dtype.  Weights/biases resident.
        # o_ref: (1, NC, CHUNK) f32 -- one lane-dense row per chunk.
        def strip(c):
            start = c * chunk
            if not isinstance(start, int):
                start = pl.multiple_of(start, chunk)
            xc = x_ref[pl.ds(start, chunk), :]                        # (CHUNK, D)

            # Layer 1: Linear(D, 32) + ReLU (MXU matmul, f32 accumulate).
            h1 = jnp.dot(xc, w1_ref[...], preferred_element_type=jnp.float32)
            h1 = jnp.maximum(h1 + b1_ref[...], 0.0)                   # (CHUNK, 32)

            # Layer 2: Linear(32, 16) + ReLU, all f32 (no astype round-trips).
            h2 = jnp.dot(h1, w2_ref[...], preferred_element_type=jnp.float32)
            h2 = jnp.maximum(h2 + b2_ref[...], 0.0)                   # (CHUNK, 16)

            # Layer 3: Linear(16, 1) + Sigmoid, computed transposed so the
            # per-chunk result is a lane-dense (1, CHUNK) row:
            #   h3[0, b] = sum_k w3[0, k] * h2[b, k]
            h3 = jnp.einsum("ok,bk->ob", w3_ref[...], h2,
                            preferred_element_type=jnp.float32)       # (1, CHUNK)
            y = jax.nn.sigmoid(h3 + b3_ref[...])                      # (1, CHUNK)

            o_ref[0, pl.ds(c, 1), :] = y.astype(o_ref.dtype)

        if num_chunks == 1:
            strip(0)
        else:
            def body(c, carry):
                strip(c)
                return carry
            lax.fori_loop(0, num_chunks, body, 0, unroll=(num_chunks <= 16))

    return kernel


def mlp_forward(x, params, *, block_b=16384, chunk=1024):
    """x: [B, D] (float32, or bfloat16 if the caller stores it that way in HBM —
    it is streamed in its native dtype, never copied/cast in the wrapper).
    params: w1(D,32), b1(1,32), w2(32,16), b2(1,16), w3(16,1), b3(1,1) in
    (in, out) layout.  Returns [B, 1] float32."""
    B, D = x.shape
    f32 = jnp.float32

    # --- Tile sizing --------------------------------------------------------
    # CHUNK: in-kernel compute strip (multiple of 128).
    # TB:    streamed DMA block rows (multiple of CHUNK, hence of 128 -> the
    #        output rows are lane-dense, unmasked stores).
    CHUNK = _round_up(max(128, min(chunk, block_b, B)), 128)
    TB = _round_up(min(block_b, max(B, 1)), CHUNK)
    NC = TB // CHUNK
    num_tiles = pl.cdiv(B, TB)
    # Default working set (f32 x, TB=16384, CHUNK=1024):
    #   2 x (TB, 64) f32 x-stream buffers   ~ 8.0 MiB
    #   2 x (1, NC, CHUNK) f32 out buffers  ~ 0.13 MiB
    #   lane-padded per-chunk intermediates ~ 1.5-2 MiB
    #   resident weights                    < 0.1 MiB
    # => ~10 MiB, under the default scoped-VMEM limit on v5e/v6e/v7x.

    # Only pad when the whole batch is smaller than a single tile (cheap).
    # Multi-tile ragged last blocks use Pallas block padding: garbage rows are
    # row-independent and discarded by the [:B] slice below.
    if B < TB:
        x = jnp.pad(x, ((0, TB - B), (0, 0)))

    # Layer-1 weights match x's streamed dtype (bf16 only if x is bf16 in HBM);
    # layers 2/3 weights and all biases stay f32 (tiny, resident).
    w1 = params["w1"].astype(x.dtype)                  # (D, 32)
    b1 = params["b1"].astype(f32)                      # (1, 32)
    w2 = params["w2"].astype(f32)                      # (32, 16)
    b2 = params["b2"].astype(f32)                      # (1, 16)
    w3 = params["w3"].reshape(1, 16).astype(f32)       # (1, 16) row layout
    b3 = params["b3"].reshape(1, 1).astype(f32)        # (1, 1)

    # Resident (constant-index) blocks: DMA'd once, kept in VMEM across the grid.
    def resident(a):
        nd = a.ndim
        return pl.BlockSpec(a.shape, lambda i, _nd=nd: (0,) * _nd)

    out = pl.pallas_call(
        _make_kernel(CHUNK, NC),
        out_shape=jax.ShapeDtypeStruct((num_tiles, NC, CHUNK), f32),
        grid_spec=pltpu.PrefetchScalarGridSpec(
            num_scalar_prefetch=0,
            grid=(num_tiles,),
            in_specs=[
                pl.BlockSpec((TB, D), lambda i: (i, 0)),   # streamed x tiles
                resident(w1), resident(b1),
                resident(w2), resident(b2),
                resident(w3), resident(b3),
            ],
            out_specs=pl.BlockSpec((1, NC, CHUNK), lambda i: (i, 0, 0)),
        ),
        compiler_params=pltpu.CompilerParams(
            dimension_semantics=("parallel",),             # megacore split on v7x
        ),
    )(x, w1, b1, w2, b2, w3, b3)

    return out.reshape(num_tiles * TB, 1)[:B]


def init_params(key, input_dim):
    """Deterministic init matching PyTorch nn.Linear shapes (stored as (in, out))."""
    ks = jax.random.split(key, 6)

    def linear(kw, kb, fan_in, fan_out):
        bound = 1.0 / jnp.sqrt(fan_in)
        w = jax.random.uniform(kw, (fan_in, fan_out), jnp.float32, -bound, bound)
        b = jax.random.uniform(kb, (1, fan_out), jnp.float32, -bound, bound)
        return w, b

    w1, b1 = linear(ks[0], ks[1], input_dim, 32)
    w2, b2 = linear(ks[2], ks[3], 32, 16)
    w3, b3 = linear(ks[4], ks[5], 16, 1)
    return {"w1": w1, "b1": b1, "w2": w2, "b2": b2, "w3": w3, "b3": b3}


def mlp_reference(x, p):
    h1 = jnp.maximum(x @ p["w1"] + p["b1"], 0.0)
    h2 = jnp.maximum(h1 @ p["w2"] + p["b2"], 0.0)
    return jax.nn.sigmoid(h2 @ p["w3"] + p["b3"])


if __name__ == "__main__":
    key = jax.random.PRNGKey(0)
    k_x, k_p, k_x2 = jax.random.split(key, 3)

    batch, input_dim = 8, 64
    x = jax.random.normal(k_x, (batch, input_dim), dtype=jnp.float32)
    params = init_params(k_p, input_dim)
    ref = mlp_reference(x, params)

    # f32 end-to-end (x streamed as f32, all layers f32): tight tolerance.
    out_f32 = jax.block_until_ready(mlp_forward(x, params))
    assert out_f32.shape == (batch, 1)
    assert jnp.allclose(out_f32, ref, atol=1e-5, rtol=1e-5)

    # Bandwidth-optimized path: caller stores x in bf16 in HBM; layer-1 weights
    # follow, layers 2/3 stay f32.  Looser tolerance.
    out_bf16 = jax.block_until_ready(mlp_forward(x.astype(jnp.bfloat16), params))
    assert out_bf16.shape == (batch, 1)
    assert jnp.allclose(out_bf16, ref, atol=2e-2, rtol=2e-2)

    # Non-aligned batch: multi-tile pipelined grid, ragged last tile (no
    # full-array pad) and multi-chunk strip-mining inside the kernel.
    batch2 = 1000
    x2 = jax.random.normal(k_x2, (batch2, input_dim), dtype=jnp.float32)
    ref2 = mlp_reference(x2, params)
    out2 = jax.block_until_ready(mlp_forward(x2, params, block_b=256, chunk=128))
    assert out2.shape == (batch2, 1)
    assert jnp.allclose(out2, ref2, atol=1e-5, rtol=1e-5)

    print("KERNEL_OK")
</pallas_src>

<mosaic_0001>
module attributes {stable_mosaic.version = 11 : i64} {
  func.func @kernel(%arg0: i32, %arg1: memref<128x64xf32, #tpu.memory_space<vmem>>, %arg2: memref<64x32xf32, #tpu.memory_space<vmem>>, %arg3: memref<1x32xf32, #tpu.memory_space<vmem>>, %arg4: memref<32x16xf32, #tpu.memory_space<vmem>>, %arg5: memref<1x16xf32, #tpu.memory_space<vmem>>, %arg6: memref<1x16xf32, #tpu.memory_space<vmem>>, %arg7: memref<1x1xf32, #tpu.memory_space<vmem>>, %arg8: memref<1x1x128xf32, #tpu.memory_space<vmem>>) attributes {dimension_semantics = [#tpu.dimension_semantics<parallel>], iteration_bounds = array<i64: 1>, scalar_prefetch = 0 : i64, scratch_operands = 0 : i64, tpu.core_type = #tpu.core_type<tc>, window_params = [{transform_indices = @transform_0, window_bounds = array<i64: 128, 64>}, {pipeline_mode = #tpu.pipeline_mode<synchronous>, transform_indices = @transform_1, window_bounds = array<i64: 64, 32>}, {pipeline_mode = #tpu.pipeline_mode<synchronous>, transform_indices = @transform_2, window_bounds = array<i64: 1, 32>}, {pipeline_mode = #tpu.pipeline_mode<synchronous>, transform_indices = @transform_3, window_bounds = array<i64: 32, 16>}, {pipeline_mode = #tpu.pipeline_mode<synchronous>, transform_indices = @transform_4, window_bounds = array<i64: 1, 16>}, {pipeline_mode = #tpu.pipeline_mode<synchronous>, transform_indices = @transform_5, window_bounds = array<i64: 1, 16>}, {pipeline_mode = #tpu.pipeline_mode<synchronous>, transform_indices = @transform_6, window_bounds = array<i64: 1, 1>}, {transform_indices = @transform_7, window_bounds = array<i64: 1, 1, 128>}]} {
    %c0 = arith.constant 0 : index
    %c0_0 = arith.constant 0 : index
    %0 = vector.load %arg1[%c0, %c0_0] : memref<128x64xf32, #tpu.memory_space<vmem>>, vector<128x64xf32>
    %c0_1 = arith.constant 0 : index
    %c0_2 = arith.constant 0 : index
    %1 = vector.load %arg2[%c0_1, %c0_2] : memref<64x32xf32, #tpu.memory_space<vmem>>, vector<64x32xf32>
    %cst = arith.constant dense<0.000000e+00> : vector<128x32xf32>
    %2 = tpu.matmul %0, %1, %cst {dimension_numbers = #tpu.dot_dimension_numbers<[1], [0], [0], [1], [0, 0, 1, 1], [], []>} : vector<128x64xf32>, vector<64x32xf32>, vector<128x32xf32> -> vector<128x32xf32>
    %c0_3 = arith.constant 0 : index
    %c0_4 = arith.constant 0 : index
    %3 = vector.load %arg3[%c0_3, %c0_4] : memref<1x32xf32, #tpu.memory_space<vmem>>, vector<1x32xf32>
    %4 = vector.broadcast %3 : vector<1x32xf32> to vector<128x32xf32>
    %5 = arith.addf %2, %4 : vector<128x32xf32>
    %cst_5 = arith.constant 0.000000e+00 : f32
    %6 = vector.broadcast %cst_5 : f32 to vector<128x32xf32>
    %7 = arith.maximumf %5, %6 : vector<128x32xf32>
    %c0_6 = arith.constant 0 : index
    %c0_7 = arith.constant 0 : index
    %8 = vector.load %arg4[%c0_6, %c0_7] : memref<32x16xf32, #tpu.memory_space<vmem>>, vector<32x16xf32>
    %cst_8 = arith.constant dense<0.000000e+00> : vector<128x16xf32>
    %9 = tpu.matmul %7, %8, %cst_8 {dimension_numbers = #tpu.dot_dimension_numbers<[1], [0], [0], [1], [0, 0, 1, 1], [], []>} : vector<128x32xf32>, vector<32x16xf32>, vector<128x16xf32> -> vector<128x16xf32>
    %c0_9 = arith.constant 0 : index
    %c0_10 = arith.constant 0 : index
    %10 = vector.load %arg5[%c0_9, %c0_10] : memref<1x16xf32, #tpu.memory_space<vmem>>, vector<1x16xf32>
    %11 = vector.broadcast %10 : vector<1x16xf32> to vector<128x16xf32>
    %12 = arith.addf %9, %11 : vector<128x16xf32>
    %cst_11 = arith.constant 0.000000e+00 : f32
    %13 = vector.broadcast %cst_11 : f32 to vector<128x16xf32>
    %14 = arith.maximumf %12, %13 : vector<128x16xf32>
    %c0_12 = arith.constant 0 : index
    %c0_13 = arith.constant 0 : index
    %15 = vector.load %arg6[%c0_12, %c0_13] : memref<1x16xf32, #tpu.memory_space<vmem>>, vector<1x16xf32>
    "tpu.trace_start"() <{level = 10 : i32, message = "ok,bk->ob"}> : () -> ()
    %cst_14 = arith.constant dense<0.000000e+00> : vector<1x128xf32>
    %16 = tpu.matmul %15, %14, %cst_14 {dimension_numbers = #tpu.dot_dimension_numbers<[1], [1], [0], [0], [0, 0, 1, 0], [], []>} : vector<1x16xf32>, vector<128x16xf32>, vector<1x128xf32> -> vector<1x128xf32>
    "tpu.trace_stop"() : () -> ()
    %c0_15 = arith.constant 0 : index
    %c0_16 = arith.constant 0 : index
    %17 = vector.load %arg7[%c0_15, %c0_16] : memref<1x1xf32, #tpu.memory_space<vmem>>, vector<1x1xf32>
    %18 = vector.broadcast %17 : vector<1x1xf32> to vector<1x128xf32>
    %19 = arith.addf %16, %18 : vector<1x128xf32>
    %20 = arith.negf %19 : vector<1x128xf32>
    %21 = math.exp %20 : vector<1x128xf32>
    %cst_17 = arith.constant 1.000000e+00 : f32
    %22 = vector.broadcast %cst_17 : f32 to vector<1x128xf32>
    %23 = arith.addf %22, %21 : vector<1x128xf32>
    %24 = arith.divf %22, %23 : vector<1x128xf32>
    %c0_18 = arith.constant 0 : index
    %c0_19 = arith.constant 0 : index
    %c0_20 = arith.constant 0 : index
    %25 = vector.load %arg8[%c0_18, %c0_19, %c0_20] : memref<1x1x128xf32, #tpu.memory_space<vmem>>, vector<1x1x128xf32>
    %26 = vector.shape_cast %25 : vector<1x1x128xf32> to vector<1x128xf32>
    %27 = vector.shape_cast %24 : vector<1x128xf32> to vector<1x1x128xf32>
    tpu.vector_store %arg8[%c0_18, %c0_19, %c0_20], %27 {strides = array<i32>} : memref<1x1x128xf32, #tpu.memory_space<vmem>>, vector<1x1x128xf32>,
    return
  }
  func.func @transform_0(%arg0: i32) -> (i32, i32) {
    %c0_i32 = arith.constant 0 : i32
    %c0_i32_0 = arith.constant 0 : i32
    return %arg0, %c0_i32 : i32, i32
  }
  func.func @transform_1(%arg0: i32) -> (i32, i32) {
    %c0_i32 = arith.constant 0 : i32
    %c0_i32_0 = arith.constant 0 : i32
    %c0_i32_1 = arith.constant 0 : i32
    return %c0_i32, %c0_i32_0 : i32, i32
  }
  func.func @transform_2(%arg0: i32) -> (i32, i32) {
    %c0_i32 = arith.constant 0 : i32
    %c0_i32_0 = arith.constant 0 : i32
    %c0_i32_1 = arith.constant 0 : i32
    return %c0_i32, %c0_i32_0 : i32, i32
  }
  func.func @transform_3(%arg0: i32) -> (i32, i32) {
    %c0_i32 = arith.constant 0 : i32
    %c0_i32_0 = arith.constant 0 : i32
    %c0_i32_1 = arith.constant 0 : i32
    return %c0_i32, %c0_i32_0 : i32, i32
  }
  func.func @transform_4(%arg0: i32) -> (i32, i32) {
    %c0_i32 = arith.constant 0 : i32
    %c0_i32_0 = arith.constant 0 : i32
    %c0_i32_1 = arith.constant 0 : i32
    return %c0_i32, %c0_i32_0 : i32, i32
  }
  func.func @transform_5(%arg0: i32) -> (i32, i32) {
    %c0_i32 = arith.constant 0 : i32
    %c0_i32_0 = arith.constant 0 : i32
    %c0_i32_1 = arith.constant 0 : i32
    return %c0_i32, %c0_i32_0 : i32, i32
  }
  func.func @transform_6(%arg0: i32) -> (i32, i32) {
    %c0_i32 = arith.constant 0 : i32
    %c0_i32_0 = arith.constant 0 : i32
    %c0_i32_1 = arith.constant 0 : i32
    return %c0_i32, %c0_i32_0 : i32, i32
  }
  func.func @transform_7(%arg0: i32) -> (i32, i32, i32) {
    %c0_i32 = arith.constant 0 : i32
    %c0_i32_0 = arith.constant 0 : i32
    %c0_i32_1 = arith.constant 0 : i32
    return %arg0, %c0_i32, %c0_i32_0 : i32, i32, i32
  }
}

</mosaic_0001>

<llo_original>
// kernel: tpu_custom_call.1
$region0: #{tpu_custom_call.1}
  #allocation0 [shape = 'u32[]', space=smem, size = 0x4, offset = 0x4, fixed_abs, tag = 'smem constant byte address 0x4 - core index']
  #allocation1 [shape = 'u32[72,128]{1,0:T(1,128)}', space=vmem, size = 0x9000, scoped, tag = 'internal scratch']
  #allocation2 [shape = 'f32[1,1]{1,0:T(1,128)S(1)}', space=vmem, size = 0x200, scoped, tag = 'scoped memory for tpu_custom_call.1']
  %s0 = inlined_call_operand.vmem [shape: f32[128,64], index: 0, kind: input, shape index: {}]
  %s1 = inlined_call_operand.vmem [shape: f32[64,32], index: 1, kind: input, shape index: {}]
  %s2 = inlined_call_operand.vmem [shape: f32[1,32], index: 2, kind: input, shape index: {}]
  %s3 = inlined_call_operand.vmem [shape: f32[32,16], index: 3, kind: input, shape index: {}]
  %s4 = inlined_call_operand.vmem [shape: f32[1,16], index: 4, kind: input, shape index: {}]
  %s5 = inlined_call_operand.vmem [shape: f32[1,16], index: 5, kind: input, shape index: {}]
  %s6 = inlined_call_operand.<no memory space> [shape: f32[1,1], index: 6, kind: input, shape index: {}]
  %s7 = inlined_call_operand.hbm [shape: f32[1,1,128], index: 7, kind: output, shape index: {}]
  %s8 = sld [smem:[#allocation0]]
  $region38: #{tpu_custom_call.1} parent=0
    _
  %s10 = ssub.s32 1, %s8
  %s11 = scalar_select 0, %s10, %s8
  %v12 = vstv %s6
  %13 = vst [vmem:[#allocation2] sm:$0x1] %v12
  $region1: #{tpu_custom_call.1} parent=0
    #allocation3 [shape = 'u8[512]{0}', space=vmem, size = 0x400, scoped, tag = 'output window, operand 0, single buffered']
    #allocation4 [shape = 's32[1]{0}', space=sflag, size = 0x4, scoped, tag = 'scoped memory for tpu_custom_call.1']
    %14 = vsyncpa [#allocation4], 0
    // Predicated region
    $region2: #{tpu_custom_call.1} parent=1 // pred_check
      _
    $region3: #{tpu_custom_call.1} parent=1 // pred_check_branch
      %16 = sbr.rel (0) target = $region5
    $region4: #{tpu_custom_call.1} parent=1 // pred_region
      _
    $region5: #{tpu_custom_call.1} parent=1 // pred_fallthru
      _
    // Predicated region
    $region6: #{tpu_custom_call.1} parent=1 // pred_check
      _
    $region7: #{tpu_custom_call.1} parent=1 // pred_check_branch
      %18 = sbr.rel (0) target = $region9
    $region8: #{tpu_custom_call.1} parent=1 // pred_region
      _
    $region9: #{tpu_custom_call.1} parent=1 // pred_fallthru
      _
    // Predicated region
    $region10: #{tpu_custom_call.1} parent=1 // pred_check
      _
    $region11: #{tpu_custom_call.1} parent=1 // pred_check_branch
      %20 = sbr.rel (0) target = $region13
    $region12: #{tpu_custom_call.1} parent=1 // pred_region
      _
    $region13: #{tpu_custom_call.1} parent=1 // pred_fallthru
      _
    // Predicated region
    $region14: #{tpu_custom_call.1} parent=1 // pred_check
      _
    $region15: #{tpu_custom_call.1} parent=1 // pred_check_branch
      %22 = sbr.rel (0) target = $region17
    $region16: #{tpu_custom_call.1} parent=1 // pred_region
      _
    $region17: #{tpu_custom_call.1} parent=1 // pred_fallthru
      _
    // Predicated region
    $region18: #{tpu_custom_call.1} parent=1 // pred_check
      _
    $region19: #{tpu_custom_call.1} parent=1 // pred_check_branch
      %24 = sbr.rel (0) target = $region21
    $region20: #{tpu_custom_call.1} parent=1 // pred_region
      _
    $region21: #{tpu_custom_call.1} parent=1 // pred_fallthru
      _
    // Predicated region
    $region22: #{tpu_custom_call.1} parent=1 // pred_check
      _
    $region23: #{tpu_custom_call.1} parent=1 // pred_check_branch
      %26 = sbr.rel (0) target = $region25
    $region24: #{tpu_custom_call.1} parent=1 // pred_region
      _
    $region25: #{tpu_custom_call.1} parent=1 // pred_fallthru
      _
    // Predicated region
    $region26: #{tpu_custom_call.1} parent=1 // pred_check
      _
    $region27: #{tpu_custom_call.1} parent=1 // pred_check_branch
      %28 = sbr.rel (0) target = $region29
    $region28: #{tpu_custom_call.1} parent=1 // pred_region
      _
    $region29: #{tpu_custom_call.1} parent=1 // pred_fallthru
      _
    %v29 = vld [vmem:[%s0] sm:$0xff]
    %v30 = vld [vmem:[%s0 + $0x8] sm:$0xff]
    %v31 = vld [vmem:[%s0 + $0x10] sm:$0xff]
    %v32 = vld [vmem:[%s0 + $0x18] sm:$0xff]
    %v33 = vld [vmem:[%s0 + $0x20] sm:$0xff]
    %v34 = vld [vmem:[%s0 + $0x28] sm:$0xff]
    %v35 = vld [vmem:[%s0 + $0x30] sm:$0xff]
    %v36 = vld [vmem:[%s0 + $0x38] sm:$0xff]
    %v37 = vld [vmem:[%s0 + $0x40] sm:$0xff]
    %v38 = vld [vmem:[%s0 + $0x48] sm:$0xff]
    %v39 = vld [vmem:[%s0 + $0x50] sm:$0xff]
    %v40 = vld [vmem:[%s0 + $0x58] sm:$0xff]
    %v41 = vld [vmem:[%s0 + $0x60] sm:$0xff]
    %v42 = vld [vmem:[%s0 + $0x68] sm:$0xff]
    %v43 = vld [vmem:[%s0 + $0x70] sm:$0xff]
    %v44 = vld [vmem:[%s0 + $0x78] sm:$0xff]
    %v45 = vld [vmem:[%s1] sm:$0xff]
    %v46 = vld [vmem:[%s1 + $0x8] sm:$0xff]
    %v47 = vld [vmem:[%s1 + $0x10] sm:$0xff]
    %v48 = vld [vmem:[%s1 + $0x18] sm:$0xff]
    %v49 = vld [vmem:[%s1 + $0x20] sm:$0xff]
    %v50 = vld [vmem:[%s1 + $0x28] sm:$0xff]
    %v51 = vld [vmem:[%s1 + $0x30] sm:$0xff]
    %v52 = vld [vmem:[%s1 + $0x38] sm:$0xff]
    %v53 = vld [vmem:[%s2] sm:$0x1]
    %v55 = vperm.slane %v53, 0
    %vm57 = vcmask 523264
    %v59 = vsel %vm57, %v29, 0
    %v62 = vsel %vm57, %v30, 0
    %v65 = vsel %vm57, %v31, 0
    %v68 = vsel %vm57, %v32, 0
    %v71 = vsel %vm57, %v33, 0
    %v74 = vsel %vm57, %v34, 0
    %v77 = vsel %vm57, %v35, 0
    %v80 = vsel %vm57, %v36, 0
    %v83 = vsel %vm57, %v37, 0
    %v86 = vsel %vm57, %v38, 0
    %v89 = vsel %vm57, %v39, 0
    %v92 = vsel %vm57, %v40, 0
    %v95 = vsel %vm57, %v41, 0
    %v98 = vsel %vm57, %v42, 0
    %v101 = vsel %vm57, %v43, 0
    %v104 = vsel %vm57, %v44, 0
    %106 = vmatpush.msra.mxu0 0.0
    %107 = vmatpush.msra.mxu0 0.0
    %108 = vmatpush.msra.mxu0 0.0
    %109 = vmatpush.msra.mxu0 0.0
    %110 = vmatpush.msra.mxu0 0.0
    %111 = vmatpush.msra.mxu0 0.0
    %112 = vmatpush.msra.mxu0 0.0
    %113 = vmatpush.msra.mxu0 0.0
    %114 = vmatpush.msra.mxu0 %v52
    %115 = vmatpush.msra.mxu0 %v51
    %116 = vmatpush.msra.mxu0 %v50
    %117 = vmatpush.msra.mxu0 %v49
    %118 = vmatpush.msra.mxu0 %v48
    %119 = vmatpush.msra.mxu0 %v47
    %120 = vmatpush.msra.mxu0 %v46
    %121 = vmatpush.msra.mxu0 %v45
    %122 = vmatmul.f32.gmra.mxu0 %v59
    %v123 = vpop.f32.mrf.mxu0
    %v124 = vadd.f32 %v55, %v123
    %125 = vmatmul.f32.gmra.mxu0 %v62
    %v126 = vpop.f32.mrf.mxu0
    %v127 = vadd.f32 %v55, %v126
    %128 = vmatmul.f32.gmra.mxu0 %v65
    %v129 = vpop.f32.mrf.mxu0
    %v130 = vadd.f32 %v55, %v129
    %131 = vmatmul.f32.gmra.mxu0 %v68
    %v132 = vpop.f32.mrf.mxu0
    %v133 = vadd.f32 %v55, %v132
    %134 = vmatmul.f32.gmra.mxu0 %v71
    %v135 = vpop.f32.mrf.mxu0
    %v136 = vadd.f32 %v55, %v135
    %137 = vmatmul.f32.gmra.mxu0 %v74
    %v138 = vpop.f32.mrf.mxu0
    %v139 = vadd.f32 %v55, %v138
    %140 = vmatmul.f32.gmra.mxu0 %v77
    %v141 = vpop.f32.mrf.mxu0
    %v142 = vadd.f32 %v55, %v141
    %143 = vmatmul.f32.gmra.mxu0 %v80
    %v144 = vpop.f32.mrf.mxu0
    %v145 = vadd.f32 %v55, %v144
    %146 = vmatmul.f32.gmra.mxu0 %v83
    %v147 = vpop.f32.mrf.mxu0
    %v148 = vadd.f32 %v55, %v147
    %149 = vmatmul.f32.gmra.mxu0 %v86
    %v150 = vpop.f32.mrf.mxu0
    %v151 = vadd.f32 %v55, %v150
    %152 = vmatmul.f32.gmra.mxu0 %v89
    %v153 = vpop.f32.mrf.mxu0
    %v154 = vadd.f32 %v55, %v153
    %155 = vmatmul.f32.gmra.mxu0 %v92
    %v156 = vpop.f32.mrf.mxu0
    %v157 = vadd.f32 %v55, %v156
    %158 = vmatmul.f32.gmra.mxu0 %v95
    %v159 = vpop.f32.mrf.mxu0
    %v160 = vadd.f32 %v55, %v159
    %161 = vmatmul.f32.gmra.mxu0 %v98
    %v162 = vpop.f32.mrf.mxu0
    %v163 = vadd.f32 %v55, %v162
    %164 = vmatmul.f32.gmra.mxu0 %v101
    %v165 = vpop.f32.mrf.mxu0
    %v166 = vadd.f32 %v55, %v165
    %167 = vmatmul.f32.gmra.mxu0 %v104
    %v168 = vpop.f32.mrf.mxu0
    %v169 = vadd.f32 %v55, %v168
    %170 = vdwg.mxu0
    %v171 = vmax.f32 %v124, 0.0
    %v172 = vmax.f32 %v127, 0.0
    %v173 = vmax.f32 %v130, 0.0
    %v174 = vmax.f32 %v133, 0.0
    %v175 = vmax.f32 %v136, 0.0
    %v176 = vmax.f32 %v139, 0.0
    %v177 = vmax.f32 %v142, 0.0
    %v178 = vmax.f32 %v145, 0.0
    %v179 = vmax.f32 %v148, 0.0
    %v180 = vmax.f32 %v151, 0.0
    %v181 = vmax.f32 %v154, 0.0
    %v182 = vmax.f32 %v157, 0.0
    %v183 = vmax.f32 %v160, 0.0
    %v184 = vmax.f32 %v163, 0.0
    %v185 = vmax.f32 %v166, 0.0
    %v186 = vmax.f32 %v169, 0.0
    %v187 = vld [vmem:[%s3] sm:$0xff]
    %v188 = vld [vmem:[%s3 + $0x8] sm:$0xff]
    %v189 = vld [vmem:[%s3 + $0x10] sm:$0xff]
    %v190 = vld [vmem:[%s3 + $0x18] sm:$0xff]
    %v191 = vld [vmem:[%s4] sm:$0x1]
    %v193 = vperm.slane %v191, 0
    %vm195 = vcmask 261120
    %v197 = vsel %vm195, %v171, 0
    %v200 = vsel %vm195, %v172, 0
    %v203 = vsel %vm195, %v173, 0
    %v206 = vsel %vm195, %v174, 0
    %v209 = vsel %vm195, %v175, 0
    %v212 = vsel %vm195, %v176, 0
    %v215 = vsel %vm195, %v177, 0
    %v218 = vsel %vm195, %v178, 0
    %v221 = vsel %vm195, %v179, 0
    %v224 = vsel %vm195, %v180, 0
    %v227 = vsel %vm195, %v181, 0
    %v230 = vsel %vm195, %v182, 0
    %v233 = vsel %vm195, %v183, 0
    %v236 = vsel %vm195, %v184, 0
    %v239 = vsel %vm195, %v185, 0
    %v242 = vsel %vm195, %v186, 0
    %244 = vmatpush.msra.mxu0 0.0
    %245 = vmatpush.msra.mxu0 0.0
    %246 = vmatpush.msra.mxu0 0.0
    %247 = vmatpush.msra.mxu0 0.0
    %248 = vmatpush.msra.mxu0 0.0
    %249 = vmatpush.msra.mxu0 0.0
    %250 = vmatpush.msra.mxu0 0.0
    %251 = vmatpush.msra.mxu0 0.0
    %252 = vmatpush.msra.mxu0 0.0
    %253 = vmatpush.msra.mxu0 0.0
    %254 = vmatpush.msra.mxu0 0.0
    %255 = vmatpush.msra.mxu0 0.0
    %256 = vmatpush.msra.mxu0 %v190
    %257 = vmatpush.msra.mxu0 %v189
    %258 = vmatpush.msra.mxu0 %v188
    %259 = vmatpush.msra.mxu0 %v187
    %260 = vmatmul.f32.gmra.mxu0 %v197
    %v261 = vpop.f32.mrf.mxu0
    %v262 = vadd.f32 %v193, %v261
    %263 = vmatmul.f32.gmra.mxu0 %v200
    %v264 = vpop.f32.mrf.mxu0
    %v265 = vadd.f32 %v193, %v264
    %266 = vmatmul.f32.gmra.mxu0 %v203
    %v267 = vpop.f32.mrf.mxu0
    %v268 = vadd.f32 %v193, %v267
    %269 = vmatmul.f32.gmra.mxu0 %v206
    %v270 = vpop.f32.mrf.mxu0
    %v271 = vadd.f32 %v193, %v270
    %272 = vmatmul.f32.gmra.mxu0 %v209
    %v273 = vpop.f32.mrf.mxu0
    %v274 = vadd.f32 %v193, %v273
    %275 = vmatmul.f32.gmra.mxu0 %v212
    %v276 = vpop.f32.mrf.mxu0
    %v277 = vadd.f32 %v193, %v276
    %278 = vmatmul.f32.gmra.mxu0 %v215
    %v279 = vpop.f32.mrf.mxu0
    %v280 = vadd.f32 %v193, %v279
    %281 = vmatmul.f32.gmra.mxu0 %v218
    %v282 = vpop.f32.mrf.mxu0
    %v283 = vadd.f32 %v193, %v282
    %284 = vmatmul.f32.gmra.mxu0 %v221
    %v285 = vpop.f32.mrf.mxu0
    %v286 = vadd.f32 %v193, %v285
    %287 = vmatmul.f32.gmra.mxu0 %v224
    %v288 = vpop.f32.mrf.mxu0
    %v289 = vadd.f32 %v193, %v288
    %290 = vmatmul.f32.gmra.mxu0 %v227
    %v291 = vpop.f32.mrf.mxu0
    %v292 = vadd.f32 %v193, %v291
    %293 = vmatmul.f32.gmra.mxu0 %v230
    %v294 = vpop.f32.mrf.mxu0
    %v295 = vadd.f32 %v193, %v294
    %296 = vmatmul.f32.gmra.mxu0 %v233
    %v297 = vpop.f32.mrf.mxu0
    %v298 = vadd.f32 %v193, %v297
    %299 = vmatmul.f32.gmra.mxu0 %v236
    %v300 = vpop.f32.mrf.mxu0
    %v301 = vadd.f32 %v193, %v300
    %302 = vmatmul.f32.gmra.mxu0 %v239
    %v303 = vpop.f32.mrf.mxu0
    %v304 = vadd.f32 %v193, %v303
    %305 = vmatmul.f32.gmra.mxu0 %v242
    %v306 = vpop.f32.mrf.mxu0
    %v307 = vadd.f32 %v193, %v306
    %308 = vdwg.mxu0
    %v309 = vmax.f32 %v262, 0.0
    %v310 = vmax.f32 %v265, 0.0
    %v311 = vmax.f32 %v268, 0.0
    %v312 = vmax.f32 %v271, 0.0
    %v313 = vmax.f32 %v274, 0.0
    %v314 = vmax.f32 %v277, 0.0
    %v315 = vmax.f32 %v280, 0.0
    %v316 = vmax.f32 %v283, 0.0
    %v317 = vmax.f32 %v286, 0.0
    %v318 = vmax.f32 %v289, 0.0
    %v319 = vmax.f32 %v292, 0.0
    %v320 = vmax.f32 %v295, 0.0
    %v321 = vmax.f32 %v298, 0.0
    %v322 = vmax.f32 %v301, 0.0
    %v323 = vmax.f32 %v304, 0.0
    %v324 = vmax.f32 %v307, 0.0
    %v325 = vld [vmem:[%s5] sm:$0x1]
    %v326 = vld [vmem:[#allocation2] sm:$0x1]
    %328 = vset.pattern.permute.xlu0 0
    %329 = vperm.xlu0 %328, %v326
    %v330 = vpop.permute.xlu0 %329
    %v332 = vperm.slane %v330, 0
    %vm333 = vcmask 130048
    %v335 = vsel %vm333, %v325, 0
    %v338 = vsel %vm333, %v309, 0
    %v341 = vsel %vm333, %v310, 0
    %v344 = vsel %vm333, %v311, 0
    %v347 = vsel %vm333, %v312, 0
    %v350 = vsel %vm333, %v313, 0
    %v353 = vsel %vm333, %v314, 0
    %v356 = vsel %vm333, %v315, 0
    %v359 = vsel %vm333, %v316, 0
    %v362 = vsel %vm333, %v317, 0
    %v365 = vsel %vm333, %v318, 0
    %v368 = vsel %vm333, %v319, 0
    %v371 = vsel %vm333, %v320, 0
    %v374 = vsel %vm333, %v321, 0
    %v377 = vsel %vm333, %v322, 0
    %v380 = vsel %vm333, %v323, 0
    %v383 = vsel %vm333, %v324, 0
    %385 = vmatpush.xpose.msra.mxu0 %v383
    %386 = vmatpush.xpose.msra.mxu0 %v380
    %387 = vmatpush.xpose.msra.mxu0 %v377
    %388 = vmatpush.xpose.msra.mxu0 %v374
    %389 = vmatpush.xpose.msra.mxu0 %v371
    %390 = vmatpush.xpose.msra.mxu0 %v368
    %391 = vmatpush.xpose.msra.mxu0 %v365
    %392 = vmatpush.xpose.msra.mxu0 %v362
    %393 = vmatpush.xpose.msra.mxu0 %v359
    %394 = vmatpush.xpose.msra.mxu0 %v356
    %395 = vmatpush.xpose.msra.mxu0 %v353
    %396 = vmatpush.xpose.msra.mxu0 %v350
    %397 = vmatpush.xpose.msra.mxu0 %v347
    %398 = vmatpush.xpose.msra.mxu0 %v344
    %399 = vmatpush.xpose.msra.mxu0 %v341
    %400 = vmatpush.xpose.msra.mxu0 %v338
    %401 = vmatmul.f32.gmra.mxu0 %v335
    %v402 = vpop.f32.mrf.mxu0
    %v403 = vadd.f32 %v332, %v402
    %404 = vdwg.mxu0
    %v405 = vxor.u32 %v403, 2147483648
    %v406 = vmul.f32 %v405, 1.442695
    %v407 = vpow.pop %v406
    %v408 = vadd.f32 %v407, 1.0
    %v409 = vrcp.pop %v408
    %v410 = vmul.f32 %v408, %v409
    %v411 = vsub.f32 1.0, %v410
    %v412 = vmul.f32 %v409, %v411
    %v413 = vadd.f32 %v409, %v412
    %vm414 = vweird.f32 %v408
    %vm415 = vweird.f32 %v409
    %vm416 = vmor %vm414, %vm415
    %v417 = vsel %vm416, %v409, %v413
    %v418 = vand.u32 2147483647, %v408
    %vm419 = vcmp.eq.f32.partialorder %v418, 8.507059e+37
    %v420 = vand.u32 %v408, 2147483648
    %v421 = vor.u32 1.1754944e-38, %v420
    %v422 = vsel %vm419, %v421, %v417
    %v423 = vmul.f32 1.0, %v422
    %424 = vst [vmem:[#allocation3] sm:$0x1] %v423
    // Predicated region
    $region30: #{tpu_custom_call.1} parent=1 // pred_check
      _
    $region31: #{tpu_custom_call.1} parent=1 // pred_check_branch
      %426 = sbr.rel (0) target = $region33
    $region32: #{tpu_custom_call.1} parent=1 // pred_region
      %428 = vsyncadd [#allocation4], 0
      %s430 = sshll.u32 [#allocation3], 4
      %s431 = int_to_ptr.vmem [resolvable:$true] %s430
      %s432 = sshll.u32 %s7, 4
      %s433 = int_to_ptr.hbm [resolvable:$true] %s432
      %435 = dma.vmem_to_hbm [thread:$0]  %s431, 16, %s433, [#allocation4]
    $region33: #{tpu_custom_call.1} parent=1 // pred_fallthru
      _
    // Predicated region
    $region34: #{tpu_custom_call.1} parent=1 // pred_check
      _
    $region35: #{tpu_custom_call.1} parent=1 // pred_check_branch
      %437 = sbr.rel (0) target = $region37
    $region36: #{tpu_custom_call.1} parent=1 // pred_region
      %439 = dma.done [#allocation4], 16
    $region37: #{tpu_custom_call.1} parent=1 // pred_fallthru
      _
    %440 = vsyncpa [#allocation4], 1

</llo_original>
